<compile_context>
chip_gen: v7x
topology: tpu7x:2x2x1
jax: 0.10.0
libtpu: 0.0.40
codegen_flags: <defaults>
</compile_context>

<pallas_src>
import itertools

import numpy as np
import jax
import jax.numpy as jnp
from jax.experimental import pallas as pl
from jax.experimental.pallas import tpu as pltpu

_LANE = 128
_SUBLANE = 8


def _round_up(x, m):
    return (x + m - 1) // m * m


def _pick_tile_n(n, row_bytes):
    """Rows per grid step.

    >= ~4 grid steps so v7x's two TensorCores both get work and the pipeliner
    has blocks to overlap; capped at 1024 rows to amortize the ~0.35us/step
    overhead on single-TC v5e/v6e; capped again so per-block temporaries stay
    well inside VMEM.
    """
    tile = -(-n // 4)
    tile = _round_up(max(tile, 1), _SUBLANE)
    tile = min(tile, 1024)
    cap = max(_SUBLANE, (8 << 20) // max(row_bytes, 1))
    cap = max(_SUBLANE, (cap // _SUBLANE) * _SUBLANE)
    return max(_SUBLANE, min(tile, cap))


def _pad_labels(labels_i32, n, npad):
    labels2d = labels_i32.reshape(n, 1)
    if npad == n:
        return labels2d
    return jnp.zeros((npad, 1), jnp.int32).at[:n].set(labels2d)


# ----------------------------------------------------------------------------
# Path A ('atomic' / 'atomic_or_none'):
#   out[n, :] = permuted_masks[labels[n], :]  via one-hot + bf16 MXU matmul.
#   Exact: 0/1 values, exactly one hit per row.
# ----------------------------------------------------------------------------
def _onehot_gather_kernel(labels_ref, table_ref, out_ref):
    labels = labels_ref[...]                    # (tile_n, 1) int32
    table = table_ref[...]                      # (K, Zcols)  bf16 {0, 1}
    tile_n = labels.shape[0]
    k = table.shape[0]

    iota_k = jax.lax.broadcasted_iota(jnp.int32, (tile_n, k), 1)
    onehot = (iota_k == labels).astype(jnp.bfloat16)            # (tile_n, K)
    out = jnp.dot(onehot, table, preferred_element_type=jnp.float32)
    out_ref[...] = out.astype(out_ref.dtype)    # int8 / int32, lane-dense


def _onehot_forward(labels_i32, table_bf16, n, zcols, out_dtype):
    k = table_bf16.shape[0]
    out_isize = np.dtype(out_dtype).itemsize
    row_bytes = 4 + k * 6 + zcols * (4 + out_isize)        # per-row temporaries
    tile_n = _pick_tile_n(n, row_bytes)
    npad = _round_up(n, tile_n)
    labels2d = _pad_labels(labels_i32, n, npad)

    # Double-buffered label + output blocks, the (resident) bf16 table, and
    # the f32/one-hot temporaries.
    vmem_need = (2 * tile_n * 4 + 2 * k * zcols * 2
                 + 2 * tile_n * zcols * out_isize
                 + tile_n * (k + zcols) * 4 + (2 << 20))
    cp_kwargs = {"dimension_semantics": ("parallel",)}
    if vmem_need > (16 << 20):
        cp_kwargs["vmem_limit_bytes"] = int(min(vmem_need, 64 << 20))

    out = pl.pallas_call(
        _onehot_gather_kernel,
        out_shape=jax.ShapeDtypeStruct((npad, zcols), out_dtype),
        grid=(npad // tile_n,),
        in_specs=[
            pl.BlockSpec((tile_n, 1), lambda i: (i, 0)),
            pl.BlockSpec((k, zcols), lambda i: (0, 0)),
        ],
        out_specs=pl.BlockSpec((tile_n, zcols), lambda i: (i, 0)),
        compiler_params=pltpu.CompilerParams(**cp_kwargs),
    )(labels2d, table_bf16)
    return out[:n] if npad != n else out


# ----------------------------------------------------------------------------
# Path B ('all'): no mask table at all.
#   out[n, k] = (perm_label[n] >> k) & 1  computed as a bit test against a
#   precomputed (1, Zcols) row of 2**k weights (0 for padded lanes).
# ----------------------------------------------------------------------------
def _bitmask_kernel(labels_ref, weights_ref, out_ref):
    lbl = labels_ref[...]                       # (tile_n, 1) int32, permuted
    w = weights_ref[...]                        # (1, Zcols)  int32: 2**k or 0
    bits = jnp.bitwise_and(lbl, w) != 0         # VPU, broadcasts to full block
    out_ref[...] = bits.astype(out_ref.dtype)


def _bitmask_forward(perm_labels_i32, bit_weights, n, zcols, out_dtype):
    out_isize = np.dtype(out_dtype).itemsize
    row_bytes = 4 + zcols * (4 + out_isize)
    tile_n = _pick_tile_n(n, row_bytes)
    npad = _round_up(n, tile_n)
    labels2d = _pad_labels(perm_labels_i32, n, npad)

    out = pl.pallas_call(
        _bitmask_kernel,
        out_shape=jax.ShapeDtypeStruct((npad, zcols), out_dtype),
        grid=(npad // tile_n,),
        in_specs=[
            pl.BlockSpec((tile_n, 1), lambda i: (i, 0)),
            pl.BlockSpec((1, zcols), lambda i: (0, 0)),
        ],
        out_specs=pl.BlockSpec((tile_n, zcols), lambda i: (i, 0)),
        compiler_params=pltpu.CompilerParams(
            dimension_semantics=("parallel",)),
    )(labels2d, bit_weights)
    return out[:n] if npad != n else out


# ----------------------------------------------------------------------------
# Deterministic "module __init__" glue (plain Python / numpy, no checkpoints).
# ----------------------------------------------------------------------------
def generate_interventions(dim_z, intervention_set):
    if intervention_set == "all":
        n_interventions = 2 ** dim_z
        masks = [[bool((idx >> kk) & 1) for kk in range(dim_z)]
                 for idx in range(n_interventions)]
    elif intervention_set == "atomic_or_none":
        n_interventions = dim_z + 1
        masks = [[False] * dim_z]
        for idx in range(dim_z):
            masks.append([idx == kk for kk in range(dim_z)])
    elif intervention_set == "atomic":
        n_interventions = dim_z
        masks = [[idx == kk for kk in range(dim_z)]
                 for idx in range(n_interventions)]
    else:
        raise ValueError(intervention_set)
    return np.array(masks, dtype=bool), n_interventions


def generate_permutation(permutation, n_interventions):
    idx = list(range(n_interventions))
    perm = None
    for i, p in enumerate(itertools.permutations(idx)):
        if i == permutation:
            perm = p
            break
    assert perm is not None
    perm = np.array(perm, dtype=np.int32)
    inv = np.argsort(perm).astype(np.int32)
    return perm, inv


# ----------------------------------------------------------------------------
# Module equivalent.  All static config (permutation fold, lane padding, bit
# weights) is precomputed once here, not in the per-call hot path.
# ----------------------------------------------------------------------------
class InterventionPriorPallas:
    def __init__(self, permutation=0, dim_z=2, intervention_set="atomic_or_none"):
        assert intervention_set in {"atomic_or_none", "atomic", "all"}
        self.intervention_set = intervention_set
        self.dim_z = dim_z
        self._masks_np, self.n_interventions = generate_interventions(
            dim_z, intervention_set)
        self._perm_np, self._inv_perm_np = generate_permutation(
            permutation, self.n_interventions)
        self._perm_is_identity = bool(
            np.array_equal(self._perm_np, np.arange(self.n_interventions)))
        self._permutation = jnp.asarray(self._perm_np, jnp.int32)

        # Lane-dense output width; skip padding entirely when already aligned.
        self.zcols = dim_z if dim_z % _LANE == 0 else _round_up(dim_z, _LANE)

        if intervention_set == "all":
            # Bit-test weights: 2**k for k < dim_z, 0 for padded lanes.
            w = np.zeros((1, self.zcols), np.int32)
            w[0, :dim_z] = np.left_shift(1, np.arange(dim_z, dtype=np.int64)
                                         ).astype(np.int32)
            self._bit_weights = jnp.asarray(w)
            self._table_bf16 = None
        else:
            # Fold the static permutation into the mask table once:
            # pm[i] = masks[permutation[i]], padded to lane width, bf16 {0,1}.
            pm = self._masks_np[self._perm_np].astype(np.float32)
            pm_pad = np.zeros((self.n_interventions, self.zcols), np.float32)
            pm_pad[:, :dim_z] = pm
            self._table_bf16 = jnp.asarray(pm_pad, jnp.bfloat16)
            self._bit_weights = None

    def __call__(self, intervention_label, convert_to_int=False):
        return self.forward(intervention_label, convert_to_int=convert_to_int)

    def forward(self, intervention_label, convert_to_int=False):
        assert intervention_label.ndim == 1
        n = intervention_label.shape[0]
        k = self.n_interventions
        # NOTE: PyTorch asserts labels are in range; here out-of-range labels
        # are clamped instead of erroring (kept kernel-safe).
        labels = jnp.clip(intervention_label.astype(jnp.int32), 0, k - 1)
        out_dtype = jnp.int32 if convert_to_int else jnp.int8

        if self.intervention_set == "all":
            if self._perm_is_identity:
                perm_labels = labels
            else:
                perm_labels = jnp.take(self._permutation, labels)  # N ints
            out = _bitmask_forward(perm_labels, self._bit_weights,
                                   n, self.zcols, out_dtype)
        else:
            out = _onehot_forward(labels, self._table_bf16,
                                  n, self.zcols, out_dtype)

        if self.zcols != self.dim_z:
            out = out[:, :self.dim_z]
        if convert_to_int:
            return out                       # kernel already wrote int32
        return out.astype(jnp.bool_)
        # TODO(synk): emit bool directly from the kernel once i1 outputs lower
        # reliably on all generations; the int8->bool pass is the only extra
        # traffic left on this path.

    # TODO(synk): inverse() and sample() are host-side label bookkeeping / RNG
    # and are intentionally not kernelized.


# ----------------------------------------------------------------------------
# Self-test.
# ----------------------------------------------------------------------------
def _check_case(dim_z, intervention_set, permutation_id, batch, key):
    prior = InterventionPriorPallas(permutation=permutation_id, dim_z=dim_z,
                                    intervention_set=intervention_set)
    labels = jax.random.randint(key, (batch,), 0, prior.n_interventions,
                                dtype=jnp.int32)
    labels_np = np.asarray(labels)
    ref = prior._masks_np[prior._perm_np[labels_np]]

    out = jax.block_until_ready(prior(labels, convert_to_int=False))
    assert out.shape == (batch, dim_z)
    assert out.dtype == jnp.bool_
    np.testing.assert_array_equal(np.asarray(out), ref)

    out_int = jax.block_until_ready(prior(labels, convert_to_int=True))
    assert out_int.dtype == jnp.int32
    np.testing.assert_array_equal(np.asarray(out_int), ref.astype(np.int32))


if __name__ == "__main__":
    key = jax.random.PRNGKey(0)
    k0, k1, k2, k3 = jax.random.split(key, 4)

    # One-hot MXU path: dim_z=6, atomic_or_none -> 7 interventions.
    _check_case(dim_z=6, intervention_set="atomic_or_none",
                permutation_id=3, batch=16, key=k0)

    # Bit-extraction path: dim_z=8, 'all' -> 256 interventions, no table.
    _check_case(dim_z=8, intervention_set="all",
                permutation_id=3, batch=32, key=k1)

    # Padding / ragged-batch path: batch not a multiple of the tile.
    _check_case(dim_z=4, intervention_set="atomic",
                permutation_id=0, batch=40, key=k2)

    # Lane-aligned path (dim_z % 128 == 0): no pad, no slice.
    _check_case(dim_z=128, intervention_set="atomic",
                permutation_id=0, batch=24, key=k3)

    print("KERNEL_OK")
</pallas_src>

<mosaic_0001>
module attributes {stable_mosaic.version = 11 : i64} {
  func.func @_onehot_gather_kernel(%arg0: i32, %arg1: memref<8x1xi32, #tpu.memory_space<vmem>>, %arg2: memref<7x128xbf16, #tpu.memory_space<vmem>>, %arg3: memref<8x128xi8, #tpu.memory_space<vmem>>) attributes {dimension_semantics = [#tpu.dimension_semantics<parallel>], iteration_bounds = array<i64: 2>, scalar_prefetch = 0 : i64, scratch_operands = 0 : i64, tpu.core_type = #tpu.core_type<tc>, window_params = [{transform_indices = @transform_0, window_bounds = array<i64: 8, 1>}, {pipeline_mode = #tpu.pipeline_mode<synchronous>, transform_indices = @transform_1, window_bounds = array<i64: 7, 128>}, {transform_indices = @transform_2, window_bounds = array<i64: 8, 128>}]} {
    %c0 = arith.constant 0 : index
    %c0_0 = arith.constant 0 : index
    %0 = vector.load %arg1[%c0, %c0_0] : memref<8x1xi32, #tpu.memory_space<vmem>>, vector<8x1xi32>
    %c0_1 = arith.constant 0 : index
    %c0_2 = arith.constant 0 : index
    %1 = vector.load %arg2[%c0_1, %c0_2] : memref<7x128xbf16, #tpu.memory_space<vmem>>, vector<7x128xbf16>
    %2 = tpu.iota {dimensions = array<i32: 1>} : vector<8x7xi32>
    %3 = vector.broadcast %0 : vector<8x1xi32> to vector<8x7xi32>
    %4 = arith.cmpi eq, %2, %3 : vector<8x7xi32>
    %5 = arith.extui %4 : vector<8x7xi1> to vector<8x7xi32>
    %6 = arith.sitofp %5 : vector<8x7xi32> to vector<8x7xf32>
    %7 = arith.truncf %6 : vector<8x7xf32> to vector<8x7xbf16>
    %cst = arith.constant dense<0.000000e+00> : vector<8x128xf32>
    %8 = tpu.matmul %7, %1, %cst {dimension_numbers = #tpu.dot_dimension_numbers<[1], [0], [0], [1], [0, 0, 1, 1], [], []>} : vector<8x7xbf16>, vector<7x128xbf16>, vector<8x128xf32> -> vector<8x128xf32>
    %9 = arith.fptosi %8 : vector<8x128xf32> to vector<8x128xi8>
    %c0_3 = arith.constant 0 : index
    %c0_4 = arith.constant 0 : index
    %10 = vector.load %arg3[%c0_3, %c0_4] : memref<8x128xi8, #tpu.memory_space<vmem>>, vector<8x128xi8>
    tpu.vector_store %arg3[%c0_3, %c0_4], %9 {strides = array<i32>} : memref<8x128xi8, #tpu.memory_space<vmem>>, vector<8x128xi8>,
    return
  }
  func.func @transform_0(%arg0: i32) -> (i32, i32) {
    %c0_i32 = arith.constant 0 : i32
    %c0_i32_0 = arith.constant 0 : i32
    return %arg0, %c0_i32 : i32, i32
  }
  func.func @transform_1(%arg0: i32) -> (i32, i32) {
    %c0_i32 = arith.constant 0 : i32
    %c0_i32_0 = arith.constant 0 : i32
    %c0_i32_1 = arith.constant 0 : i32
    return %c0_i32, %c0_i32_0 : i32, i32
  }
  func.func @transform_2(%arg0: i32) -> (i32, i32) {
    %c0_i32 = arith.constant 0 : i32
    %c0_i32_0 = arith.constant 0 : i32
    return %arg0, %c0_i32 : i32, i32
  }
}

</mosaic_0001>

<llo_original>
// kernel: tpu_custom_call.1
$region0: #{tpu_custom_call.1}
  #allocation0 [shape = 'u32[]', space=smem, size = 0x4, offset = 0x4, fixed_abs, tag = 'smem constant byte address 0x4 - core index']
  #allocation1 [shape = 'u32[144,128]{1,0:T(1,128)}', space=vmem, size = 0x12000, scoped, tag = 'internal scratch']
  %s0 = inlined_call_operand.vmem [shape: s32[16,1], index: 0, kind: input, shape index: {}]
  %s1 = inlined_call_operand.vmem [shape: bf16[7,128], index: 1, kind: input, shape index: {}]
  %s2 = inlined_call_operand.hbm [shape: s8[16,128], index: 2, kind: output, shape index: {}]
  %s3 = sld [smem:[#allocation0]]
  $region41: #{tpu_custom_call.1} parent=0
    _
  %s5 = ssub.s32 1, %s3
  %s6 = scalar_select 0, %s5, %s3
  $region1: #{tpu_custom_call.1} parent=0
    #allocation2 [shape = 'u8[2048]{0}', space=vmem, size = 0x800, scoped, tag = 'output window, operand 0']
    #allocation3 [shape = 's32[2]{0}', space=sflag, size = 0x8, scoped, tag = 'scoped memory for tpu_custom_call.1']
    %7 = vsyncpa [#allocation3], 0
    %s8 = scalar_lea.sflag [#allocation3], 1
    %9 = vsyncpa %s8, 0
    loop: start=0, step=1, limit=4
    $region2: #{tpu_custom_call.1} parent=1 // loop_pre_header
      _
    $region3: #{tpu_custom_call.1} parent=1 // loop_header
      %s11 = sphi 0, %s15
      %p12 = scmp.ge.s32.totalorder %s11, 4
      %s21 = sphi 0, %s23
      %s24 = sphi 0, %s21
      %s25 = sphi 0, %s24
      %s41 = sphi 0, %s25
      %s45 = sphi 0, %s45
      %s47 = sphi 0, %s45
      %s48 = sphi 0, %s47
      %s62 = sphi 0, %s48
      %s68 = sphi 0, %s70
      %s71 = sphi 0, %s68
      %s72 = sphi 0, %s71
      %s88 = sphi 0, %s72
    $region4: #{tpu_custom_call.1} parent=1 // loop_header_branch
      %14 = sbr.rel (%p12) target = $region8
    $region5: #{tpu_custom_call.1} parent=1 // loop_body
      %s16 = ssub.s32 %s11, 1
      %s17 = ssub.s32 %s11, 2
      %s18 = sadd.s32 %s11, 1
      %s19 = ssub.s32 %s11, %s18
      %p20 = scmp.eq.s32.totalorder %s19, 0
      %s22 = sadd.s32 %s21, 1
      %s23 = scalar_select %p20, %s21, %s22
      %p26 = pneg %p20
      %p27 = scmp.eq.s32.totalorder %s11, 1
      %p28 = por %p26, %p27
      %p29 = scmp.ne.s32.totalorder %s21, %s24
      %p30 = scmp.eq.s32.totalorder %s11, 0
      %p31 = por %p29, %p30
      %p32 = scmp.ne.s32.totalorder %s21, %s24
      %p33 = scmp.eq.s32.totalorder %s16, 1
      %p34 = por %p32, %p33
      %p35 = scmp.ne.s32.totalorder %s24, %s25
      %p36 = scmp.eq.s32.totalorder %s16, 0
      %p37 = por %p35, %p36
      %p38 = scmp.ne.s32.totalorder %s24, %s25
      %p39 = scmp.eq.s32.totalorder %s17, 1
      %p40 = por %p38, %p39
      %p42 = scmp.ne.s32.totalorder %s25, %s41
      %p43 = scmp.eq.s32.totalorder %s17, 0
      %p44 = por %p42, %p43
      %s46 = sadd.s32 %s45, 1
      %p49 = scmp.eq.s32.totalorder %s11, 1
      %p50 = scmp.ne.s32.totalorder %s45, %s47
      %p51 = scmp.eq.s32.totalorder %s11, 0
      %p52 = por %p50, %p51
      %p53 = scmp.ne.s32.totalorder %s45, %s47
      %p54 = scmp.eq.s32.totalorder %s16, 1
      %p55 = por %p53, %p54
      %p56 = scmp.ne.s32.totalorder %s47, %s48
      %p57 = scmp.eq.s32.totalorder %s16, 0
      %p58 = por %p56, %p57
      %p59 = scmp.ne.s32.totalorder %s47, %s48
      %p60 = scmp.eq.s32.totalorder %s17, 1
      %p61 = por %p59, %p60
      %p63 = scmp.ne.s32.totalorder %s48, %s62
      %p64 = scmp.eq.s32.totalorder %s17, 0
      %p65 = por %p63, %p64
      %s66 = ssub.s32 %s11, %s18
      %p67 = scmp.eq.s32.totalorder %s66, 0
      %s69 = sadd.s32 %s68, 1
      %s70 = scalar_select %p67, %s68, %s69
      %p73 = pneg %p67
      %p74 = scmp.eq.s32.totalorder %s11, 1
      %p75 = por %p73, %p74
      %p76 = scmp.ne.s32.totalorder %s68, %s71
      %p77 = scmp.eq.s32.totalorder %s11, 0
      %p78 = por %p76, %p77
      %p79 = scmp.ne.s32.totalorder %s68, %s71
      %p80 = scmp.eq.s32.totalorder %s16, 1
      %p81 = por %p79, %p80
      %p82 = scmp.ne.s32.totalorder %s71, %s72
      %p83 = scmp.eq.s32.totalorder %s16, 0
      %p84 = por %p82, %p83
      %p85 = scmp.ne.s32.totalorder %s71, %s72
      %p86 = scmp.eq.s32.totalorder %s17, 1
      %p87 = por %p85, %p86
      %p89 = scmp.ne.s32.totalorder %s72, %s88
      %p90 = scmp.eq.s32.totalorder %s17, 0
      %p91 = por %p89, %p90
      %p92 = scmp.le.s32.totalorder 1, %s11
      %p93 = scmp.lt.s32.totalorder %s11, 3
      %p94 = pnand %p92, %p93
      %p95 = pneg %p94
      // Predicated region
      $region9: #{tpu_custom_call.1} parent=5 // pred_check
        _
      $region10: #{tpu_custom_call.1} parent=5 // pred_check_branch
        %97 = sbr.rel (%p94) target = $region12
      $region11: #{tpu_custom_call.1} parent=5 // pred_region
        %s98 = ssub.s32 %s11, 1
        // Predicated region
        $region13: #{tpu_custom_call.1} parent=11 // pred_check
          %p99 = pneg %p58
        $region14: #{tpu_custom_call.1} parent=11 // pred_check_branch
          %101 = sbr.rel (%p99) target = $region16
        $region15: #{tpu_custom_call.1} parent=11 // pred_region
          _
        $region16: #{tpu_custom_call.1} parent=11 // pred_fallthru
          _
      $region12: #{tpu_custom_call.1} parent=5 // pred_fallthru
        _
      %p102 = scmp.lt.s32.totalorder %s11, 2
      // Predicated region
      $region17: #{tpu_custom_call.1} parent=5 // pred_check
        %p103 = pneg %p102
      $region18: #{tpu_custom_call.1} parent=5 // pred_check_branch
        %105 = sbr.rel (%p103) target = $region20
      $region19: #{tpu_custom_call.1} parent=5 // pred_region
        // Predicated region
        $region21: #{tpu_custom_call.1} parent=19 // pred_check
          %p106 = pneg %p31
        $region22: #{tpu_custom_call.1} parent=19 // pred_check_branch
          %108 = sbr.rel (%p106) target = $region24
        $region23: #{tpu_custom_call.1} parent=19 // pred_region
          %p109 = scmp.lt.s32.totalorder %s11, 1
          %s110 = scalar_select %p109, %s11, 1
          %s111 = smul.addr %s110, 8
          %s112 = scalar_lea.vmem %s0, %s111
        $region24: #{tpu_custom_call.1} parent=19 // pred_fallthru
          _
      $region20: #{tpu_custom_call.1} parent=5 // pred_fallthru
        _
      %p113 = scmp.le.s32.totalorder 1, %s11
      %p114 = scmp.lt.s32.totalorder %s11, 3
      %p115 = pnand %p113, %p114
      %p116 = pneg %p115
      // Predicated region
      $region25: #{tpu_custom_call.1} parent=5 // pred_check
        _
      $region26: #{tpu_custom_call.1} parent=5 // pred_check_branch
        %118 = sbr.rel (%p115) target = $region28
      $region27: #{tpu_custom_call.1} parent=5 // pred_region
        %s119 = ssub.s32 %s11, 1
        %p120 = scmp.lt.s32.totalorder %s16, 1
        %s121 = scalar_select %p120, %s16, 1
        %s122 = smul.addr %s121, 8
        %s123 = scalar_lea.vmem %s0, %s122
        %p124 = pneg %p37
        %p125 = pneg %p34
        %p126 = pneg %p58
        %p127 = pneg %p55
        %p128 = pneg %p84
        %p129 = pneg %p81
        %s130 = sand.u32 %s71, 1
        %s131 = scalar_lea.sflag [#allocation3], %s130
        %s132 = sand.u32 %s71, 1
        %s133 = smul.addr %s132, 2
        %s134 = scalar_lea.vmem [#allocation2], %s133
        %p135 = scmp.lt.s32.totalorder %s16, 1
        %s136 = scalar_select %p135, %s16, 1
        %s137 = smul.addr %s136, 8
        %s138 = scalar_lea.vmem %s0, %s137
        %v140 = vld [vmem:[%s138] sm:$0xff]
        %v141 = vld [vmem:[%s1] sm:$0xf]
        %v142 = vlaneseq
        %v143 = vand.u32 %v142, 127
        %144 = vset.pattern.permute.xlu0 0
        %145 = vperm.xlu0 %144, %v140
        %v146 = vpop.permute.xlu0 %145
        %vm147 = vcmp.eq.s32.totalorder %v143, %v146
        %v148 = vsel %vm147, 1, 0
        %v149 = vcvt.s32.f32 %v148
        %v150 = vpack.c.bf16 %v149, %v149
        %vm151 = vcmask 56320
        %v153 = vsel %vm151, %v150, 0
        %vm155 = vcmask 1042432
        %vm156 = vcmask 1043456
        %v157 = vsel %vm155, 4294967295, 65535
        %v158 = vsel %vm156, %v157, 0
        %v160 = vand.u32 %v141, %v158
        %162 = vmatprep.subr.bf16.mxu0 0
        %163 = vmatpush1.bf16.msra.mxu0 %v160
        %164 = vmatprep.subr.bf16.mxu0 0
        %165 = vmatpush1.bf16.msra.mxu0 0
        %166 = vmatprep.subr.bf16.mxu0 0
        %167 = vmatpush1.bf16.msra.mxu0 0
        %168 = vmatprep.subr.bf16.mxu0 0
        %169 = vmatpush1.bf16.msra.mxu0 0
        %170 = vmatprep.subr.bf16.mxu0 0
        %171 = vmatpush1.bf16.msra.mxu0 0
        %172 = vmatprep.subr.bf16.mxu0 0
        %173 = vmatpush1.bf16.msra.mxu0 0
        %174 = vmatprep.subr.bf16.mxu0 0
        %175 = vmatpush1.bf16.msra.mxu0 0
        %176 = vmatprep.subr.bf16.mxu0 0
        %177 = vmatpush1.bf16.msra.mxu0 0
        %178 = vmatprep.subr.bf16.mxu0 0
        %179 = vmatpush1.bf16.msra.mxu0 0
        %180 = vmatprep.subr.bf16.mxu0 0
        %181 = vmatpush1.bf16.msra.mxu0 0
        %182 = vmatprep.subr.bf16.mxu0 0
        %183 = vmatpush1.bf16.msra.mxu0 0
        %184 = vmatprep.subr.bf16.mxu0 0
        %185 = vmatpush1.bf16.msra.mxu0 0
        %186 = vmatprep.subr.bf16.mxu0 0
        %187 = vmatpush1.bf16.msra.mxu0 0
        %188 = vmatprep.subr.bf16.mxu0 0
        %189 = vmatpush1.bf16.msra.mxu0 0
        %190 = vmatprep.subr.bf16.mxu0 0
        %191 = vmatpush1.bf16.msra.mxu0 0
        %192 = vmatprep.subr.bf16.mxu0 0
        %193 = vmatpush1.bf16.msra.mxu0 0
        %194 = vmatprep.mubr.bf16.mxu0 0
        %195 = vmatmul.mubr.bf16.gmra.mrb[0].mxu0 %v153
        %v196 = vpop.f32.mrb[0].mxu0
        %v197 = vadd.f32 0.0, %v196
        %v198 = vpop.f32.mrb[0].mxu0
        %v199 = vpop.f32.mrb[0].mxu0
        %v200 = vpop.f32.mrb[0].mxu0
        %201 = vdwg.mxu0
        %v202 = vtrunc.f32 %v197
        %v203 = vpack.c.f32.eXmY %v202, %v202, 312
        %v207 = vpack.c.b8 %v203, %v203
        %209 = vst [vmem:[%s134] sm:$0x3] %v207
        %s210 = sand.u32 %s71, 1
        %s211 = scalar_lea.sflag [#allocation3], %s210
        %s212 = sand.u32 %s71, 1
        %s213 = smul.addr %s212, 2
        %s214 = scalar_lea.vmem [#allocation2], %s213
        // Predicated region
        $region29: #{tpu_custom_call.1} parent=27 // pred_check
          %p215 = pneg %p81
        $region30: #{tpu_custom_call.1} parent=27 // pred_check_branch
          %217 = sbr.rel (%p215) target = $region32
        $region31: #{tpu_custom_call.1} parent=27 // pred_region
          %s219 = ssub.s32 32, 32
          %220 = vsyncadd %s211, %s219
          %s221 = smul.addr %s16, 32
          %s222 = scalar_lea.hbm %s2, %s221
          %s224 = sshll.u32 %s214, 4
          %s225 = int_to_ptr.vmem [resolvable:$true] %s224
          %227 = dma.vmem_to_hbm [thread:$0]  %s225, 32, %s222, %s211
        $region32: #{tpu_custom_call.1} parent=27 // pred_fallthru
          _
      $region28: #{tpu_custom_call.1} parent=5 // pred_fallthru
        _
      %p228 = scmp.le.s32.totalorder 2, %s11
      // Predicated region
      $region33: #{tpu_custom_call.1} parent=5 // pred_check
        %p229 = pneg %p228
      $region34: #{tpu_custom_call.1} parent=5 // pred_check_branch
        %231 = sbr.rel (%p229) target = $region36
      $region35: #{tpu_custom_call.1} parent=5 // pred_region
        %s232 = ssub.s32 %s11, 2
        // Predicated region
        $region37: #{tpu_custom_call.1} parent=35 // pred_check
          %p233 = pneg %p87
        $region38: #{tpu_custom_call.1} parent=35 // pred_check_branch
          %235 = sbr.rel (%p233) target = $region40
        $region39: #{tpu_custom_call.1} parent=35 // pred_region
          %s236 = sand.u32 %s72, 1
          %s237 = scalar_lea.sflag [#allocation3], %s236
          %s238 = sand.u32 %s72, 1
          %s239 = smul.addr %s238, 2
          %s240 = scalar_lea.vmem [#allocation2], %s239
          %241 = dma.done %s237, 32
        $region40: #{tpu_custom_call.1} parent=35 // pred_fallthru
          _
      $region36: #{tpu_custom_call.1} parent=5 // pred_fallthru
        _
    $region6: #{tpu_custom_call.1} parent=1 // loop_footer
      %s15 = sadd.s32 1, %s11
    $region7: #{tpu_custom_call.1} parent=1 // loop_footer_branch
      %10 = sbr.rel target = $region3
    $region8: #{tpu_custom_call.1} parent=1 // loop_exit
      _
    %242 = vsyncpa [#allocation3], 1
    %s243 = scalar_lea.sflag [#allocation3], 1
    %244 = vsyncpa %s243, 1

</llo_original>
